<compile_context>
chip_gen: v7x
topology: tpu7x:2x2x1
jax: 0.10.0
libtpu: 0.0.40
codegen_flags: <defaults>
</compile_context>

<pallas_src>
import functools

import jax
import jax.numpy as jnp
from jax import lax
from jax.experimental import pallas as pl
from jax.experimental.pallas import tpu as pltpu


def _round_up(x, m):
    return ((x + m - 1) // m) * m


def _pow(x, p):
    # Exact cheap paths for the common exponents (avoids jnp.power's exp/log chain).
    p = float(p)
    if p == -1.0:
        return 1.0 / x
    if p == 1.0:
        return x
    if p == -0.5:
        return lax.rsqrt(x)
    if p == 0.5:
        return jnp.sqrt(x)
    return jnp.power(x, p)


# ----------------------------------------------------------------------------
# Fused normalized matmul kernel:  out[m, :] = (sum_k adj[m, k] * feat[k, :]) * norm[m]
# ----------------------------------------------------------------------------
def _norm_matmul_kernel(adj_ref, feat_ref, norm_ref, *out_and_scratch,
                        n_out, feat_resident, tile_k):
    out_refs = out_and_scratch[:n_out]
    acc_ref = out_and_scratch[n_out]

    k = pl.program_id(1)
    n_k = pl.num_programs(1)

    @pl.when(k == 0)
    def _():
        acc_ref[...] = jnp.zeros_like(acc_ref)

    if feat_resident:
        # Whole feature matrix lives in VMEM; slice the current K window out of it.
        off = pl.multiple_of(k * tile_k, tile_k)
        feat = feat_ref[pl.ds(off, tile_k), :]
    else:
        feat = feat_ref[...]

    # Native bf16 x bf16 MXU matmul with f32 accumulation.
    acc_ref[...] += jnp.dot(adj_ref[...], feat, preferred_element_type=jnp.float32)

    @pl.when(k == n_k - 1)
    def _():
        res = acc_ref[...] * norm_ref[...]          # host-precomputed degree norm
        for o_ref in out_refs:
            o_ref[...] = res.astype(o_ref.dtype)


def hg_norm_matmul(adj, feat, norm_vec, *, emit_bf16=False, tile_m=512, tile_k=1024):
    """(adj @ feat) * norm_vec[:, None] on the MXU, returned padded to (m_pad, d_pad).

    adj:  (M, K)  any float dtype; cast to bf16 (exact for 0/1 adjacency).
    feat: (Kx, D) with Kx >= or < K (extra / missing rows handled by zero padding).
    norm_vec: (M,) f32 per-row scale.
    Returns out_f32_pad (and out_bf16_pad when emit_bf16=True).
    """
    M, K = adj.shape
    Kx, D = feat.shape
    assert norm_vec.shape == (M,)
    k_eff = max(K, Kx)

    d_pad = _round_up(D, 128)                        # lane-dense output slab
    n_out = 2 if emit_bf16 else 1

    # ---------------- tile sizing under a VMEM budget ----------------
    tile_m = min(tile_m, _round_up(M, 8))
    tile_k = min(tile_k, _round_up(k_eff, 128))

    def vmem_bytes(tm, tk, feat_buf_bytes):
        return (2 * tm * tk * 2                                  # adj double buffer (bf16)
                + feat_buf_bytes                                 # feature buffers (bf16)
                + 2 * tm * d_pad * (4 + (2 if emit_bf16 else 0)) # out buffers
                + tm * d_pad * 4                                 # f32 accumulator scratch
                + 2 * tm * 4)                                    # norm buffers

    budget = 28 * 1024 * 1024                        # safe even on v7x's 64 MiB VMEM
    while vmem_bytes(tile_m, tile_k, 2 * tile_k * d_pad * 2) > budget and tile_k > 256:
        tile_k = max(256, tile_k // 2)
    while vmem_bytes(tile_m, tile_k, 2 * tile_k * d_pad * 2) > budget and tile_m > 256:
        tile_m = max(256, _round_up(tile_m // 2, 8))

    # v7x has two TensorCores and only the parallel row axis shards across them:
    # guarantee >= 2 row tiles whenever the problem allows it.
    if _round_up(M, tile_m) == tile_m and M > 8:
        tile_m = _round_up((M + 1) // 2, 8)

    m_pad = _round_up(M, tile_m)
    k_pad = _round_up(k_eff, tile_k)

    # Keep the whole feature matrix resident in VMEM (single DMA, constant index_map)
    # when it fits; otherwise stream (tile_k, d_pad) blocks per K step.
    resident_feat_bytes = 2 * k_pad * d_pad * 2
    feat_resident = vmem_bytes(tile_m, tile_k, resident_feat_bytes) <= budget

    # ---------------- operand padding (zero padding is numerically exact) ----------------
    adj_p = adj.astype(jnp.bfloat16)
    if m_pad > M or k_pad > K:
        adj_p = jnp.pad(adj_p, ((0, m_pad - M), (0, k_pad - K)))
    feat_p = feat.astype(jnp.bfloat16)
    if k_pad > Kx or d_pad > D:
        feat_p = jnp.pad(feat_p, ((0, k_pad - Kx), (0, d_pad - D)))
    norm_p = norm_vec.astype(jnp.float32)
    if m_pad > M:
        norm_p = jnp.pad(norm_p, (0, m_pad - M))
    norm_p = norm_p.reshape(m_pad, 1)

    grid = (m_pad // tile_m, k_pad // tile_k)

    if feat_resident:
        feat_spec = pl.BlockSpec((k_pad, d_pad), lambda mi, ki: (0, 0))
    else:
        feat_spec = pl.BlockSpec((tile_k, d_pad), lambda mi, ki: (ki, 0))

    out_shapes = [jax.ShapeDtypeStruct((m_pad, d_pad), jnp.float32)]
    out_specs = [pl.BlockSpec((tile_m, d_pad), lambda mi, ki: (mi, 0))]
    if emit_bf16:
        out_shapes.append(jax.ShapeDtypeStruct((m_pad, d_pad), jnp.bfloat16))
        out_specs.append(pl.BlockSpec((tile_m, d_pad), lambda mi, ki: (mi, 0)))

    n_row_tiles = m_pad // tile_m
    cost = pl.CostEstimate(
        flops=int(2 * m_pad * k_pad * d_pad),
        transcendentals=0,
        bytes_accessed=int(m_pad * k_pad * 2
                           + (1 if feat_resident else n_row_tiles) * k_pad * d_pad * 2
                           + m_pad * d_pad * 4
                           + (m_pad * d_pad * 2 if emit_bf16 else 0)
                           + m_pad * 4),
    )

    results = pl.pallas_call(
        functools.partial(_norm_matmul_kernel, n_out=n_out,
                          feat_resident=feat_resident, tile_k=tile_k),
        out_shape=tuple(out_shapes),
        grid_spec=pltpu.PrefetchScalarGridSpec(
            num_scalar_prefetch=0,
            grid=grid,
            in_specs=[
                pl.BlockSpec((tile_m, tile_k), lambda mi, ki: (mi, ki)),   # adjacency
                feat_spec,                                                 # features
                pl.BlockSpec((tile_m, 1), lambda mi, ki: (mi, 0)),         # row norm
            ],
            out_specs=tuple(out_specs),
            scratch_shapes=[pltpu.VMEM((tile_m, d_pad), jnp.float32)],
        ),
        compiler_params=pltpu.CompilerParams(
            dimension_semantics=("parallel", "arbitrary"),
            vmem_limit_bytes=48 * 1024 * 1024,
        ),
        cost_estimate=cost,
    )(adj_p, feat_p, norm_p)

    if emit_bf16:
        return results[0], results[1]
    return results[0]


# ----------------------------------------------------------------------------
# HGCNLayer_general.forward
#   graph + etype_list -> adj_pairs: list of (A_fwd_e [N_dst_e, N_src],
#                                             A_back_e [N_src, N_dst_e])
#   h[src]             -> feat_src
# ----------------------------------------------------------------------------
def hgcn_layer_general_forward(adj_pairs, feat_src, *, norm_2=-1.0,
                               tile_m=512, tile_k=1024):
    n_src, d = feat_src.shape
    assert all(a.shape[1] == n_src and b.shape[0] == n_src for a, b in adj_pairs)

    # ----- stage 1: all forward etypes fused into one matmul (rows concatenated) -----
    a_fwd_cat = jnp.concatenate([a.astype(jnp.bfloat16) for a, _ in adj_pairs], axis=0)
    deg_fwd = jnp.concatenate(
        [jnp.maximum(a.sum(axis=1), 1.0) for a, _ in adj_pairs])       # per-dst in-degrees
    norm1 = _pow(deg_fwd, -1.0)
    rst_f32_pad, rst_bf16_pad = hg_norm_matmul(
        a_fwd_cat, feat_src, norm1, emit_bf16=True, tile_m=tile_m, tile_k=tile_k)

    # ----- stage 2: all back etypes fused (columns concatenated), padded stage-1 output
    #       fed directly as the (already bf16, already lane-padded) feature matrix -----
    a_back_cat = jnp.concatenate([b.astype(jnp.bfloat16) for _, b in adj_pairs], axis=1)
    deg_b = sum(jnp.maximum(b.sum(axis=1), 1.0) for _, b in adj_pairs)  # per-src, per-etype clamp
    norm2 = _pow(deg_b, float(norm_2))
    bsrc_pad = hg_norm_matmul(a_back_cat, rst_bf16_pad, norm2,
                              tile_m=tile_m, tile_k=tile_k)

    n_dst_last = adj_pairs[-1][0].shape[0]
    off_last = a_fwd_cat.shape[0] - n_dst_last
    rst = rst_f32_pad[off_last:off_last + n_dst_last, :d]
    bsrc = bsrc_pad[:n_src, :d]
    return bsrc, rst


# Pure-JAX reference mirroring the torch module (for verification).
# quantize_like_kernel=True applies the same bf16 rounding points as the kernel's
# bf16 MXU path (features, and stage-1 output feeding stage 2).
def hgcn_layer_general_ref(adj_pairs, feat_src, *, norm_2=-1.0, quantize_like_kernel=False):
    hp = jax.lax.Precision.HIGHEST
    f = feat_src
    if quantize_like_kernel:
        f = f.astype(jnp.bfloat16).astype(jnp.float32)
    rst_list = []
    for a_fwd, _ in adj_pairs:
        deg = jnp.maximum(a_fwd.sum(axis=1), 1.0)
        rst = jnp.dot(a_fwd, f, precision=hp) * _pow(deg, -1.0)[:, None]
        rst_list.append(rst)
    n_src = adj_pairs[0][1].shape[0]
    bsrc = jnp.zeros((n_src, feat_src.shape[1]), jnp.float32)
    deg_b = jnp.zeros((n_src,), jnp.float32)
    for (_, a_back), rst in zip(adj_pairs, rst_list):
        r = rst
        if quantize_like_kernel:
            r = r.astype(jnp.bfloat16).astype(jnp.float32)
        bsrc = bsrc + jnp.dot(a_back, r, precision=hp)
        deg_b = deg_b + jnp.maximum(a_back.sum(axis=1), 1.0)
    bsrc = bsrc * _pow(deg_b, float(norm_2))[:, None]
    return bsrc, rst_list[-1]


if __name__ == "__main__":
    key = jax.random.PRNGKey(0)
    k_adj, k_feat = jax.random.split(key, 2)

    # Small hypergraph: 48 source nodes, two etypes with 24 / 16 hyperedge nodes,
    # feature dim 128 (lane-dense).
    N_SRC, D = 48, 128
    N_DST = (24, 16)

    # Host-side graph construction (stands in for the DGL heterograph): dense binary
    # adjacency per forward etype; the back etype is the reversed relation.
    adj_pairs = []
    for kk, nd in zip(jax.random.split(k_adj, len(N_DST)), N_DST):
        a_fwd = jax.random.bernoulli(kk, p=0.4, shape=(nd, N_SRC)).astype(jnp.float32)
        adj_pairs.append((a_fwd, a_fwd.T))

    feat_src = jax.random.normal(k_feat, (N_SRC, D), dtype=jnp.float32)   # h[src]

    norm_2 = -1.0
    bsrc, rst = hgcn_layer_general_forward(adj_pairs, feat_src, norm_2=norm_2)
    jax.block_until_ready((bsrc, rst))

    assert bsrc.shape == (N_SRC, D) and rst.shape == (N_DST[-1], D)

    # Strict check against a reference with the kernel's bf16 rounding points
    # (binary adjacency is exact in bf16, so only feature rounding differs).
    bsrc_q, rst_q = hgcn_layer_general_ref(adj_pairs, feat_src, norm_2=norm_2,
                                           quantize_like_kernel=True)
    assert jnp.allclose(rst, rst_q, atol=1e-4, rtol=1e-4)
    assert jnp.allclose(bsrc, bsrc_q, atol=1e-4, rtol=1e-4)

    # Loose sanity check against the pure-f32 module semantics.
    bsrc_f, rst_f = hgcn_layer_general_ref(adj_pairs, feat_src, norm_2=norm_2)
    assert jnp.allclose(rst, rst_f, atol=3e-2, rtol=3e-2)
    assert jnp.allclose(bsrc, bsrc_f, atol=3e-2, rtol=3e-2)

    print("KERNEL_OK")
</pallas_src>

<mosaic_0001>
module attributes {stable_mosaic.version = 11 : i64} {
  func.func @_norm_matmul_kernel(%arg0: i32, %arg1: i32, %arg2: memref<24x128xbf16, #tpu.memory_space<vmem>>, %arg3: memref<128x128xbf16, #tpu.memory_space<vmem>>, %arg4: memref<24x1xf32, #tpu.memory_space<vmem>>, %arg5: memref<24x128xf32, #tpu.memory_space<vmem>>, %arg6: memref<24x128xbf16, #tpu.memory_space<vmem>>, %arg7: memref<24x128xf32, #tpu.memory_space<vmem>>) attributes {dimension_semantics = [#tpu.dimension_semantics<parallel>, #tpu.dimension_semantics<arbitrary>], iteration_bounds = array<i64: 2, 1>, scalar_prefetch = 0 : i64, scratch_operands = 1 : i64, tpu.core_type = #tpu.core_type<tc>, window_params = [{transform_indices = @transform_0, window_bounds = array<i64: 24, 128>}, {pipeline_mode = #tpu.pipeline_mode<synchronous>, transform_indices = @transform_1, window_bounds = array<i64: 128, 128>}, {transform_indices = @transform_2, window_bounds = array<i64: 24, 1>}, {transform_indices = @transform_3, window_bounds = array<i64: 24, 128>}, {transform_indices = @transform_4, window_bounds = array<i64: 24, 128>}]} {
    %c0_i32 = arith.constant 0 : i32
    %0 = arith.cmpi eq, %arg1, %c0_i32 : i32
    %1 = arith.extui %0 : i1 to i32
    %c0_i32_0 = arith.constant 0 : i32
    %2 = arith.cmpi ne, %1, %c0_i32_0 : i32
    scf.if %2 {
      %cst_9 = arith.constant 0.000000e+00 : f32
      %15 = vector.broadcast %cst_9 : f32 to vector<24x128xf32>
      %c0_10 = arith.constant 0 : index
      %c0_11 = arith.constant 0 : index
      %16 = vector.load %arg7[%c0_10, %c0_11] : memref<24x128xf32, #tpu.memory_space<vmem>>, vector<24x128xf32>
      tpu.vector_store %arg7[%c0_10, %c0_11], %15 {strides = array<i32>} : memref<24x128xf32, #tpu.memory_space<vmem>>, vector<24x128xf32>,
    } else {
    }
    %c128_i32 = arith.constant 128 : i32
    %3 = arith.muli %arg1, %c128_i32 : i32
    %4 = tpu.assume_multiple %3, 128 : i32
    %5 = arith.index_cast %4 : i32 to index
    %c0 = arith.constant 0 : index
    %6 = vector.load %arg3[%5, %c0] : memref<128x128xbf16, #tpu.memory_space<vmem>>, vector<128x128xbf16>
    %c0_1 = arith.constant 0 : index
    %c0_2 = arith.constant 0 : index
    %7 = vector.load %arg7[%c0_1, %c0_2] : memref<24x128xf32, #tpu.memory_space<vmem>>, vector<24x128xf32>
    %c0_3 = arith.constant 0 : index
    %c0_4 = arith.constant 0 : index
    %8 = vector.load %arg2[%c0_3, %c0_4] : memref<24x128xbf16, #tpu.memory_space<vmem>>, vector<24x128xbf16>
    %cst = arith.constant dense<0.000000e+00> : vector<24x128xf32>
    %9 = tpu.matmul %8, %6, %cst {dimension_numbers = #tpu.dot_dimension_numbers<[1], [0], [0], [1], [0, 0, 1, 1], [], []>} : vector<24x128xbf16>, vector<128x128xbf16>, vector<24x128xf32> -> vector<24x128xf32>
    %10 = arith.addf %7, %9 : vector<24x128xf32>
    %c0_5 = arith.constant 0 : index
    %c0_6 = arith.constant 0 : index
    %11 = vector.load %arg7[%c0_5, %c0_6] : memref<24x128xf32, #tpu.memory_space<vmem>>, vector<24x128xf32>
    tpu.vector_store %arg7[%c0_5, %c0_6], %10 {strides = array<i32>} : memref<24x128xf32, #tpu.memory_space<vmem>>, vector<24x128xf32>,
    %c0_i32_7 = arith.constant 0 : i32
    %12 = arith.cmpi eq, %arg1, %c0_i32_7 : i32
    %13 = arith.extui %12 : i1 to i32
    %c0_i32_8 = arith.constant 0 : i32
    %14 = arith.cmpi ne, %13, %c0_i32_8 : i32
    scf.if %14 {
      %c0_9 = arith.constant 0 : index
      %c0_10 = arith.constant 0 : index
      %15 = vector.load %arg7[%c0_9, %c0_10] : memref<24x128xf32, #tpu.memory_space<vmem>>, vector<24x128xf32>
      %c0_11 = arith.constant 0 : index
      %c0_12 = arith.constant 0 : index
      %16 = vector.load %arg4[%c0_11, %c0_12] : memref<24x1xf32, #tpu.memory_space<vmem>>, vector<24x1xf32>
      %17 = vector.broadcast %16 : vector<24x1xf32> to vector<24x128xf32>
      %18 = arith.mulf %15, %17 : vector<24x128xf32>
      %c0_13 = arith.constant 0 : index
      %c0_14 = arith.constant 0 : index
      %19 = vector.load %arg5[%c0_13, %c0_14] : memref<24x128xf32, #tpu.memory_space<vmem>>, vector<24x128xf32>
      tpu.vector_store %arg5[%c0_13, %c0_14], %18 {strides = array<i32>} : memref<24x128xf32, #tpu.memory_space<vmem>>, vector<24x128xf32>,
      %20 = arith.truncf %18 : vector<24x128xf32> to vector<24x128xbf16>
      %c0_15 = arith.constant 0 : index
      %c0_16 = arith.constant 0 : index
      %21 = vector.load %arg6[%c0_15, %c0_16] : memref<24x128xbf16, #tpu.memory_space<vmem>>, vector<24x128xbf16>
      tpu.vector_store %arg6[%c0_15, %c0_16], %20 {strides = array<i32>} : memref<24x128xbf16, #tpu.memory_space<vmem>>, vector<24x128xbf16>,
    } else {
    }
    return
  }
  func.func @transform_0(%arg0: i32, %arg1: i32) -> (i32, i32) {
    %c0_i32 = arith.constant 0 : i32
    return %arg0, %arg1 : i32, i32
  }
  func.func @transform_1(%arg0: i32, %arg1: i32) -> (i32, i32) {
    %c0_i32 = arith.constant 0 : i32
    %c0_i32_0 = arith.constant 0 : i32
    %c0_i32_1 = arith.constant 0 : i32
    return %c0_i32, %c0_i32_0 : i32, i32
  }
  func.func @transform_2(%arg0: i32, %arg1: i32) -> (i32, i32) {
    %c0_i32 = arith.constant 0 : i32
    %c0_i32_0 = arith.constant 0 : i32
    return %arg0, %c0_i32 : i32, i32
  }
  func.func @transform_3(%arg0: i32, %arg1: i32) -> (i32, i32) {
    %c0_i32 = arith.constant 0 : i32
    %c0_i32_0 = arith.constant 0 : i32
    return %arg0, %c0_i32 : i32, i32
  }
  func.func @transform_4(%arg0: i32, %arg1: i32) -> (i32, i32) {
    %c0_i32 = arith.constant 0 : i32
    %c0_i32_0 = arith.constant 0 : i32
    return %arg0, %c0_i32 : i32, i32
  }
}

</mosaic_0001>

<llo_original>
// kernel: tpu_custom_call.1
$region0: #{tpu_custom_call.1}
  #allocation0 [shape = 'u32[]', space=smem, size = 0x4, offset = 0x4, fixed_abs, tag = 'smem constant byte address 0x4 - core index']
  #allocation1 [shape = 'u32[144,128]{1,0:T(1,128)}', space=vmem, size = 0x12000, scoped, tag = 'internal scratch']
  #allocation2 [shape = 'f32[24,128]{1,0:T(8,128)}', space=vmem, size = 0x3000, scoped, tag = 'scratch operand']
  %s0 = inlined_call_operand.vmem [shape: bf16[48,128], index: 0, kind: input, shape index: {}]
  %s1 = inlined_call_operand.hbm [shape: bf16[128,128], index: 1, kind: input, shape index: {}]
  %s2 = inlined_call_operand.vmem [shape: f32[48,1], index: 2, kind: input, shape index: {}]
  %s3 = inlined_call_operand.hbm [shape: f32[48,128], index: 3, kind: output, shape index: {0}]
  %s4 = inlined_call_operand.hbm [shape: bf16[48,128], index: 4, kind: output, shape index: {1}]
  %5 = xla_tuple %s3, %s4
  %s6 = sld [smem:[#allocation0]]
  $region65: #{tpu_custom_call.1} parent=0
    _
  %s8 = ssub.s32 1, %s6
  %s9 = scalar_select 0, %s8, %s6
  $region1: #{tpu_custom_call.1} parent=0
    #allocation3 [shape = 'u8[32768]{0}', space=vmem, size = 0x8000, scoped, tag = 'input window, operand 1, single buffered']
    #allocation4 [shape = 's32[2]{0}', space=sflag, size = 0x8, scoped, tag = 'scoped memory for tpu_custom_call.1']
    #allocation5 [shape = 's32[2]{0}', space=sflag, size = 0x8, scoped, tag = 'scoped memory for tpu_custom_call.1']
    #allocation6 [shape = 'u8[24576]{0}', space=vmem, size = 0x6000, scoped, tag = 'output window, operand 0']
    #allocation7 [shape = 'u8[12288]{0}', space=vmem, size = 0x3000, scoped, tag = 'output window, operand 1']
    #allocation8 [shape = 's32[2]{0}', space=sflag, size = 0x8, scoped, tag = 'scoped memory for tpu_custom_call.1']
    %10 = vsyncpa [#allocation4], 0
    %11 = vsyncpa [#allocation5], 0
    %s12 = scalar_lea.sflag [#allocation5], 1
    %13 = vsyncpa %s12, 0
    %14 = vsyncpa [#allocation8], 0
    %s15 = scalar_lea.sflag [#allocation8], 1
    %16 = vsyncpa %s15, 0
    loop: start=0, step=1, limit=4
    $region2: #{tpu_custom_call.1} parent=1 // loop_pre_header
      _
    $region3: #{tpu_custom_call.1} parent=1 // loop_header
      %s18 = sphi 0, %s22
      %p19 = scmp.ge.s32.totalorder %s18, 4
      %s25 = sphi 0, %s37
      %s26 = sphi 0, %s33
      %s27 = sphi 0, %s25
      %s28 = sphi 0, %s26
      %s29 = sphi 0, %s27
      %s30 = sphi 0, %s28
      %s42 = sphi 0, %s44
      %s45 = sphi 0, %s42
      %s46 = sphi 0, %s45
      %s62 = sphi 0, %s46
      %s66 = sphi 0, %s66
      %s68 = sphi 0, %s66
      %s69 = sphi 0, %s68
      %s83 = sphi 0, %s69
      %s89 = sphi 0, %s91
      %s92 = sphi 0, %s89
      %s93 = sphi 0, %s92
      %s109 = sphi 0, %s93
      %s115 = sphi 0, %s117
      %s118 = sphi 0, %s115
      %s119 = sphi 0, %s118
      %s135 = sphi 0, %s119
      %s141 = sphi 0, %s143
      %s144 = sphi 0, %s141
      %s145 = sphi 0, %s144
      %s161 = sphi 0, %s145
    $region4: #{tpu_custom_call.1} parent=1 // loop_header_branch
      %21 = sbr.rel (%p19) target = $region8
    $region5: #{tpu_custom_call.1} parent=1 // loop_body
      %s23 = ssub.s32 %s18, 1
      %s24 = ssub.s32 %s18, 2
      %s31 = sadd.s32 1, %s26
      %p32 = scmp.ge.s32.totalorder %s31, 1
      %s33 = scalar_select %p32, 0, %s31
      %s34 = sadd.s32 1, %s25
      %s35 = scalar_select %p32, %s34, %s25
      %p36 = scmp.ge.s32.totalorder %s35, 2
      %s37 = scalar_select %p36, 0, %s35
      %s38 = ssub.s32 %s25, %s37
      %s39 = ssub.s32 %s26, %s33
      %s40 = sor.u32 %s38, %s39
      %p41 = scmp.eq.s32.totalorder %s40, 0
      %s43 = sadd.s32 %s42, 1
      %s44 = scalar_select %p41, %s42, %s43
      %p47 = pneg %p41
      %p48 = scmp.eq.s32.totalorder %s18, 1
      %p49 = por %p47, %p48
      %p50 = scmp.ne.s32.totalorder %s42, %s45
      %p51 = scmp.eq.s32.totalorder %s18, 0
      %p52 = por %p50, %p51
      %p53 = scmp.ne.s32.totalorder %s42, %s45
      %p54 = scmp.eq.s32.totalorder %s23, 1
      %p55 = por %p53, %p54
      %p56 = scmp.ne.s32.totalorder %s45, %s46
      %p57 = scmp.eq.s32.totalorder %s23, 0
      %p58 = por %p56, %p57
      %p59 = scmp.ne.s32.totalorder %s45, %s46
      %p60 = scmp.eq.s32.totalorder %s24, 1
      %p61 = por %p59, %p60
      %p63 = scmp.ne.s32.totalorder %s46, %s62
      %p64 = scmp.eq.s32.totalorder %s24, 0
      %p65 = por %p63, %p64
      %s67 = sadd.s32 %s66, 1
      %p70 = scmp.eq.s32.totalorder %s18, 1
      %p71 = scmp.ne.s32.totalorder %s66, %s68
      %p72 = scmp.eq.s32.totalorder %s18, 0
      %p73 = por %p71, %p72
      %p74 = scmp.ne.s32.totalorder %s66, %s68
      %p75 = scmp.eq.s32.totalorder %s23, 1
      %p76 = por %p74, %p75
      %p77 = scmp.ne.s32.totalorder %s68, %s69
      %p78 = scmp.eq.s32.totalorder %s23, 0
      %p79 = por %p77, %p78
      %p80 = scmp.ne.s32.totalorder %s68, %s69
      %p81 = scmp.eq.s32.totalorder %s24, 1
      %p82 = por %p80, %p81
      %p84 = scmp.ne.s32.totalorder %s69, %s83
      %p85 = scmp.eq.s32.totalorder %s24, 0
      %p86 = por %p84, %p85
      %s87 = ssub.s32 %s25, %s37
      %p88 = scmp.eq.s32.totalorder %s87, 0
      %s90 = sadd.s32 %s89, 1
      %s91 = scalar_select %p88, %s89, %s90
      %p94 = pneg %p88
      %p95 = scmp.eq.s32.totalorder %s18, 1
      %p96 = por %p94, %p95
      %p97 = scmp.ne.s32.totalorder %s89, %s92
      %p98 = scmp.eq.s32.totalorder %s18, 0
      %p99 = por %p97, %p98
      %p100 = scmp.ne.s32.totalorder %s89, %s92
      %p101 = scmp.eq.s32.totalorder %s23, 1
      %p102 = por %p100, %p101
      %p103 = scmp.ne.s32.totalorder %s92, %s93
      %p104 = scmp.eq.s32.totalorder %s23, 0
      %p105 = por %p103, %p104
      %p106 = scmp.ne.s32.totalorder %s92, %s93
      %p107 = scmp.eq.s32.totalorder %s24, 1
      %p108 = por %p106, %p107
      %p110 = scmp.ne.s32.totalorder %s93, %s109
      %p111 = scmp.eq.s32.totalorder %s24, 0
      %p112 = por %p110, %p111
      %s113 = ssub.s32 %s25, %s37
      %p114 = scmp.eq.s32.totalorder %s113, 0
      %s116 = sadd.s32 %s115, 1
      %s117 = scalar_select %p114, %s115, %s116
      %p120 = pneg %p114
      %p121 = scmp.eq.s32.totalorder %s18, 1
      %p122 = por %p120, %p121
      %p123 = scmp.ne.s32.totalorder %s115, %s118
      %p124 = scmp.eq.s32.totalorder %s18, 0
      %p125 = por %p123, %p124
      %p126 = scmp.ne.s32.totalorder %s115, %s118
      %p127 = scmp.eq.s32.totalorder %s23, 1
      %p128 = por %p126, %p127
      %p129 = scmp.ne.s32.totalorder %s118, %s119
      %p130 = scmp.eq.s32.totalorder %s23, 0
      %p131 = por %p129, %p130
      %p132 = scmp.ne.s32.totalorder %s118, %s119
      %p133 = scmp.eq.s32.totalorder %s24, 1
      %p134 = por %p132, %p133
      %p136 = scmp.ne.s32.totalorder %s119, %s135
      %p137 = scmp.eq.s32.totalorder %s24, 0
      %p138 = por %p136, %p137
      %s139 = ssub.s32 %s25, %s37
      %p140 = scmp.eq.s32.totalorder %s139, 0
      %s142 = sadd.s32 %s141, 1
      %s143 = scalar_select %p140, %s141, %s142
      %p146 = pneg %p140
      %p147 = scmp.eq.s32.totalorder %s18, 1
      %p148 = por %p146, %p147
      %p149 = scmp.ne.s32.totalorder %s141, %s144
      %p150 = scmp.eq.s32.totalorder %s18, 0
      %p151 = por %p149, %p150
      %p152 = scmp.ne.s32.totalorder %s141, %s144
      %p153 = scmp.eq.s32.totalorder %s23, 1
      %p154 = por %p152, %p153
      %p155 = scmp.ne.s32.totalorder %s144, %s145
      %p156 = scmp.eq.s32.totalorder %s23, 0
      %p157 = por %p155, %p156
      %p158 = scmp.ne.s32.totalorder %s144, %s145
      %p159 = scmp.eq.s32.totalorder %s24, 1
      %p160 = por %p158, %p159
      %p162 = scmp.ne.s32.totalorder %s145, %s161
      %p163 = scmp.eq.s32.totalorder %s24, 0
      %p164 = por %p162, %p163
      %p165 = scmp.le.s32.totalorder 1, %s18
      %p166 = scmp.lt.s32.totalorder %s18, 3
      %p167 = pnand %p165, %p166
      %p168 = pneg %p167
      // Predicated region
      $region9: #{tpu_custom_call.1} parent=5 // pred_check
        _
      $region10: #{tpu_custom_call.1} parent=5 // pred_check_branch
        %170 = sbr.rel (%p167) target = $region12
      $region11: #{tpu_custom_call.1} parent=5 // pred_region
        %s171 = ssub.s32 %s18, 1
        // Predicated region
        $region13: #{tpu_custom_call.1} parent=11 // pred_check
          %p172 = pneg %p79
        $region14: #{tpu_custom_call.1} parent=11 // pred_check_branch
          %174 = sbr.rel (%p172) target = $region16
        $region15: #{tpu_custom_call.1} parent=11 // pred_region
          %s176 = ssub.s32 1024, 1024
          %177 = vsyncadd [#allocation4], %s176
          %s178 = sshll.u32 [#allocation3], 4
          %s179 = int_to_ptr.vmem [resolvable:$true] %s178
          %184 = dma.hbm_to_vmem [thread:$0]  %s1, 1024, %s179, [#allocation4], 64, 64, 4
        $region16: #{tpu_custom_call.1} parent=11 // pred_fallthru
          _
      $region12: #{tpu_custom_call.1} parent=5 // pred_fallthru
        _
      %p185 = scmp.lt.s32.totalorder %s18, 2
      // Predicated region
      $region17: #{tpu_custom_call.1} parent=5 // pred_check
        %p186 = pneg %p185
      $region18: #{tpu_custom_call.1} parent=5 // pred_check_branch
        %188 = sbr.rel (%p186) target = $region20
      $region19: #{tpu_custom_call.1} parent=5 // pred_region
        // Predicated region
        $region21: #{tpu_custom_call.1} parent=19 // pred_check
          %p189 = pneg %p52
        $region22: #{tpu_custom_call.1} parent=19 // pred_check_branch
          %191 = sbr.rel (%p189) target = $region24
        $region23: #{tpu_custom_call.1} parent=19 // pred_region
          %s192 = smul.u32 3, %s25
          %p193 = scmp.lt.s32.totalorder %s192, 5
          %s194 = scalar_select %p193, %s192, 5
          %p195 = scmp.lt.s32.totalorder %s26, 0
          %s196 = scalar_select %p195, %s26, 0
          %s197 = sadd.s32 %s196, %s194
          %s198 = smul.addr %s197, 4
          %s199 = scalar_lea.vmem %s0, %s198
          %s200 = smul.u32 3, %s25
        $region24: #{tpu_custom_call.1} parent=19 // pred_fallthru
          _
        // Predicated region
        $region25: #{tpu_custom_call.1} parent=19 // pred_check
          %p201 = pneg %p99
        $region26: #{tpu_custom_call.1} parent=19 // pred_check_branch
          %203 = sbr.rel (%p201) target = $region28
        $region27: #{tpu_custom_call.1} parent=19 // pred_region
          %s204 = smul.u32 3, %s25
          %p205 = scmp.lt.s32.totalorder %s204, 5
          %s206 = scalar_select %p205, %s204, 5
          %s207 = smul.addr %s206, 8
          %s208 = scalar_lea.vmem %s2, %s207
          %s209 = smul.u32 3, %s25
        $region28: #{tpu_custom_call.1} parent=19 // pred_fallthru
          _
      $region20: #{tpu_custom_call.1} parent=5 // pred_fallthru
        _
      %p210 = scmp.le.s32.totalorder 1, %s18
      %p211 = scmp.lt.s32.totalorder %s18, 3
      %p212 = pnand %p210, %p211
      %p213 = pneg %p212
      // Predicated region
      $region29: #{tpu_custom_call.1} parent=5 // pred_check
        _
      $region30: #{tpu_custom_call.1} parent=5 // pred_check_branch
        %215 = sbr.rel (%p212) target = $region32
      $region31: #{tpu_custom_call.1} parent=5 // pred_region
        %s216 = ssub.s32 %s18, 1
        // Predicated region
        $region33: #{tpu_custom_call.1} parent=31 // pred_check
          %p217 = pneg %p79
        $region34: #{tpu_custom_call.1} parent=31 // pred_check_branch
          %219 = sbr.rel (%p217) target = $region36
        $region35: #{tpu_custom_call.1} parent=31 // pred_region
          %220 = dma.done [#allocation4], 1024
        $region36: #{tpu_custom_call.1} parent=31 // pred_fallthru
          _
        %s221 = smul.u32 3, %s27
        %p222 = scmp.lt.s32.totalorder %s221, 5
        %s223 = scalar_select %p222, %s221, 5
        %p224 = scmp.lt.s32.totalorder %s28, 0
        %s225 = scalar_select %p224, %s28, 0
        %s226 = sadd.s32 %s225, %s223
        %s227 = smul.addr %s226, 4
        %s228 = scalar_lea.vmem %s0, %s227
        %p229 = pneg %p58
        %p230 = pneg %p55
        %p231 = pneg %p79
        %p232 = pneg %p76
        %s233 = smul.u32 3, %s27
        %p234 = scmp.lt.s32.totalorder %s233, 5
        %s235 = scalar_select %p234, %s233, 5
        %s236 = smul.addr %s235, 8
        %s237 = scalar_lea.vmem %s2, %s236
        %p238 = pneg %p105
        %p239 = pneg %p102
        %p240 = pneg %p131
        %p241 = pneg %p128
        %s242 = sand.u32 %s118, 1
        %s243 = scalar_lea.sflag [#allocation5], %s242
        %s244 = sand.u32 %s118, 1
        %s245 = smul.addr %s244, 24
        %s246 = scalar_lea.vmem [#allocation6], %s245
        %p247 = pneg %p157
        %p248 = pneg %p154
        %s249 = sand.u32 %s144, 1
        %s250 = scalar_lea.sflag [#allocation8], %s249
        %s251 = sand.u32 %s144, 1
        %s252 = smul.addr %s251, 12
        %s253 = scalar_lea.vmem [#allocation7], %s252
        %s254 = smul.u32 3, %s27
        %p255 = scmp.lt.s32.totalorder %s254, 5
        %s256 = scalar_select %p255, %s254, 5
        %p257 = scmp.lt.s32.totalorder %s28, 0
        %s258 = scalar_select %p257, %s28, 0
        %s259 = sadd.s32 %s258, %s256
        %s260 = smul.addr %s259, 4
        %s261 = scalar_lea.vmem %s0, %s260
        %s262 = smul.u32 3, %s27
        %s263 = smul.u32 3, %s27
        %p264 = scmp.lt.s32.totalorder %s263, 5
        %s265 = scalar_select %p264, %s263, 5
        %s266 = smul.addr %s265, 8
        %s267 = scalar_lea.vmem %s2, %s266
        %s268 = smul.u32 3, %s27
        %s269 = smul.u32 3, %s27
        %s270 = smul.u32 3, %s27
        %p272 = scmp.eq.s32.totalorder %s28, 0
        // Predicated region
        $region37: #{tpu_custom_call.1} parent=31 // pred_check
          %p273 = pneg %p272
        $region38: #{tpu_custom_call.1} parent=31 // pred_check_branch
          %275 = sbr.rel (%p273) target = $region40
        $region39: #{tpu_custom_call.1} parent=31 // pred_region
          %276 = vst [vmem:[#allocation2] sm:$0xff] 0.0
          %277 = vst [vmem:[#allocation2 + $0x8] sm:$0xff] 0.0
          %278 = vst [vmem:[#allocation2 + $0x10] sm:$0xff] 0.0
        $region40: #{tpu_custom_call.1} parent=31 // pred_fallthru
          _
        %s279 = smul.u32 %s28, 128
        %s280 = sshra.s32 %s279, 3
        %s281 = sand.u32 %s279, 7
        %s282 = smul.addr %s280, 4
        %s283 = scalar_lea.vmem [#allocation3], %s282
        %v284 = vld [vmem:[%s283] sm:$0xf]
        %v285 = vld [vmem:[%s283 + $0x4] sm:$0xf]
        %v286 = vld [vmem:[%s283 + $0x8] sm:$0xf]
        %v287 = vld [vmem:[%s283 + $0xc] sm:$0xf]
        %v288 = vld [vmem:[%s283 + $0x10] sm:$0xf]
        %v289 = vld [vmem:[%s283 + $0x14] sm:$0xf]
        %v290 = vld [vmem:[%s283 + $0x18] sm:$0xf]
        %v291 = vld [vmem:[%s283 + $0x1c] sm:$0xf]
        %v292 = vld [vmem:[%s283 + $0x20] sm:$0xf]
        %v293 = vld [vmem:[%s283 + $0x24] sm:$0xf]
        %v294 = vld [vmem:[%s283 + $0x28] sm:$0xf]
        %v295 = vld [vmem:[%s283 + $0x2c] sm:$0xf]
        %v296 = vld [vmem:[%s283 + $0x30] sm:$0xf]
        %v297 = vld [vmem:[%s283 + $0x34] sm:$0xf]
        %v298 = vld [vmem:[%s283 + $0x38] sm:$0xf]
        %v299 = vld [vmem:[%s283 + $0x3c] sm:$0xf]
        %v300 = vld [vmem:[#allocation2] sm:$0xff]
        %v301 = vld [vmem:[#allocation2 + $0x8] sm:$0xff]
        %v302 = vld [vmem:[#allocation2 + $0x10] sm:$0xff]
        %v303 = vld [vmem:[%s261] sm:$0xf]
        %v304 = vld [vmem:[%s261 + $0x4] sm:$0xf]
        %v305 = vld [vmem:[%s261 + $0x8] sm:$0xf]
        %v309 = vunpack.c.l.b16 %v303
        %v310 = vunpack.c.l.b16 %v304
        %v311 = vunpack.c.l.b16 %v305
        %v312 = vpack.c.b16 %v310, %v309
        %v313 = vpack.c.b16 %v311, %v311
        %v332 = vunpack.c.l.b16 %v284
        %v333 = vunpack.c.l.b16 %v285
        %v334 = vunpack.c.l.b16 %v286
        %v335 = vunpack.c.l.b16 %v287
        %v336 = vunpack.c.l.b16 %v288
        %v337 = vunpack.c.l.b16 %v289
        %v338 = vunpack.c.l.b16 %v290
        %v339 = vunpack.c.l.b16 %v291
        %v340 = vunpack.c.l.b16 %v292
        %v341 = vunpack.c.l.b16 %v293
        %v342 = vunpack.c.l.b16 %v294
        %v343 = vunpack.c.l.b16 %v295
        %v344 = vunpack.c.l.b16 %v296
        %v345 = vunpack.c.l.b16 %v297
        %v346 = vunpack.c.l.b16 %v298
        %v347 = vunpack.c.l.b16 %v299
        %v348 = vpack.c.b16 %v333, %v332
        %v349 = vpack.c.b16 %v335, %v334
        %v350 = vpack.c.b16 %v337, %v336
        %v351 = vpack.c.b16 %v339, %v338
        %v352 = vpack.c.b16 %v341, %v340
        %v353 = vpack.c.b16 %v343, %v342
        %v354 = vpack.c.b16 %v345, %v344
        %v355 = vpack.c.b16 %v347, %v346
        %364 = vmatprep.subr.bf16.mxu0 0
        %365 = vmatpush1.bf16.msra.mxu0 %v348
        %366 = vmatprep.subr.bf16.mxu0 0
        %367 = vmatpush1.bf16.msra.mxu0 %v349
        %368 = vmatprep.subr.bf16.mxu0 0
        %369 = vmatpush1.bf16.msra.mxu0 %v350
        %370 = vmatprep.subr.bf16.mxu0 0
        %371 = vmatpush1.bf16.msra.mxu0 %v351
        %372 = vmatprep.subr.bf16.mxu0 0
        %373 = vmatpush1.bf16.msra.mxu0 %v352
        %374 = vmatprep.subr.bf16.mxu0 0
        %375 = vmatpush1.bf16.msra.mxu0 %v353
        %376 = vmatprep.subr.bf16.mxu0 0
        %377 = vmatpush1.bf16.msra.mxu0 %v354
        %378 = vmatprep.subr.bf16.mxu0 0
        %379 = vmatpush1.bf16.msra.mxu0 %v355
        %380 = vmatprep.subr.bf16.mxu0 0
        %381 = vmatpush1.bf16.msra.mxu0 0
        %382 = vmatprep.subr.bf16.mxu0 0
        %383 = vmatpush1.bf16.msra.mxu0 0
        %384 = vmatprep.subr.bf16.mxu0 0
        %385 = vmatpush1.bf16.msra.mxu0 0
        %386 = vmatprep.subr.bf16.mxu0 0
        %387 = vmatpush1.bf16.msra.mxu0 0
        %388 = vmatprep.subr.bf16.mxu0 0
        %389 = vmatpush1.bf16.msra.mxu0 0
        %390 = vmatprep.subr.bf16.mxu0 0
        %391 = vmatpush1.bf16.msra.mxu0 0
        %392 = vmatprep.subr.bf16.mxu0 0
        %393 = vmatpush1.bf16.msra.mxu0 0
        %394 = vmatprep.subr.bf16.mxu0 0
        %395 = vmatpush1.bf16.msra.mxu0 0
        %396 = vmatprep.mubr.bf16.mxu0 0
        %397 = vmatmul.mubr.bf16.gmra.mrb[0].mxu0 %v312
        %v398 = vpop.f32.mrb[0].mxu0
        %v399 = vadd.f32 0.0, %v398
        %v400 = vpop.f32.mrb[0].mxu0
        %v401 = vpop.f32.mrb[0].mxu0
        %v402 = vadd.f32 0.0, %v401
        %v403 = vpop.f32.mrb[0].mxu0
        %404 = vmatprep.mubr.bf16.mxu0 0
        %405 = vmatmul.mubr.bf16.gmra.mrb[0].mxu0 %v313
        %v406 = vpop.f32.mrb[0].mxu0
        %v407 = vadd.f32 0.0, %v406
        %v408 = vpop.f32.mrb[0].mxu0
        %v409 = vpop.f32.mrb[0].mxu0
        %v410 = vpop.f32.mrb[0].mxu0
        %411 = vdwg.mxu0
        %v412 = vadd.f32 %v300, %v399
        %v413 = vadd.f32 %v301, %v402
        %v414 = vadd.f32 %v302, %v407
        %415 = vst [vmem:[#allocation2] sm:$0xff] %v412
        %416 = vst [vmem:[#allocation2 + $0x8] sm:$0xff] %v413
        %417 = vst [vmem:[#allocation2 + $0x10] sm:$0xff] %v414
        // Predicated region
        $region41: #{tpu_custom_call.1} parent=31 // pred_check
          %p418 = pneg %p272
        $region42: #{tpu_custom_call.1} parent=31 // pred_check_branch
          %420 = sbr.rel (%p418) target = $region44
        $region43: #{tpu_custom_call.1} parent=31 // pred_region
          %v421 = vld [vmem:[#allocation2] sm:$0xff]
          %v422 = vld [vmem:[#allocation2 + $0x8] sm:$0xff]
          %v423 = vld [vmem:[#allocation2 + $0x10] sm:$0xff]
          %v424 = vld [vmem:[%s267] sm:$0xff]
          %v425 = vld [vmem:[%s267 + $0x8] sm:$0xff]
          %v426 = vld [vmem:[%s267 + $0x10] sm:$0xff]
          %428 = vset.pattern.permute.xlu0 0
          %429 = vperm.xlu0 %428, %v424
          %v430 = vpop.permute.xlu0 %429
          %433 = vset.pattern.permute.xlu0 0
          %434 = vperm.xlu0 %433, %v425
          %v435 = vpop.permute.xlu0 %434
          %438 = vset.pattern.permute.xlu0 0
          %439 = vperm.xlu0 %438, %v426
          %v440 = vpop.permute.xlu0 %439
          %v442 = vmul.f32 %v421, %v430
          %v443 = vmul.f32 %v422, %v435
          %v444 = vmul.f32 %v423, %v440
          %445 = vst [vmem:[%s246] sm:$0xff] %v442
          %446 = vst [vmem:[%s246 + $0x8] sm:$0xff] %v443
          %447 = vst [vmem:[%s246 + $0x10] sm:$0xff] %v444
          %v448 = vpack.c.bf16 %v443, %v442
          %v449 = vpack.c.bf16 %v444, %v444
          %v452 = vunpack.c.l.b16 %v448
          %v453 = vunpack.c.h.b16 %v448
          %v454 = vunpack.c.l.b16 %v449
          %v455 = vpack.c.b16 %v452, %v452
          %v456 = vpack.c.b16 %v453, %v453
          %v457 = vpack.c.b16 %v454, %v454
          %461 = vst [vmem:[%s253] sm:$0xf] %v455
          %462 = vst [vmem:[%s253 + $0x4] sm:$0xf] %v456
          %463 = vst [vmem:[%s253 + $0x8] sm:$0xf] %v457
        $region44: #{tpu_custom_call.1} parent=31 // pred_fallthru
          _
        %s464 = sand.u32 %s118, 1
        %s465 = scalar_lea.sflag [#allocation5], %s464
        %s466 = sand.u32 %s118, 1
        %s467 = smul.addr %s466, 24
        %s468 = scalar_lea.vmem [#allocation6], %s467
        %s469 = sand.u32 %s144, 1
        %s470 = scalar_lea.sflag [#allocation8], %s469
        %s471 = sand.u32 %s144, 1
        %s472 = smul.addr %s471, 12
        %s473 = scalar_lea.vmem [#allocation7], %s472
        // Predicated region
        $region45: #{tpu_custom_call.1} parent=31 // pred_check
          %p474 = pneg %p128
        $region46: #{tpu_custom_call.1} parent=31 // pred_check_branch
          %476 = sbr.rel (%p474) target = $region48
        $region47: #{tpu_custom_call.1} parent=31 // pred_region
          %s477 = smul.u32 3, %s27
          %s479 = ssub.s32 384, 384
          %480 = vsyncadd %s465, %s479
          %s481 = smul.addr %s477, 128
          %s482 = scalar_lea.hbm %s3, %s481
          %s483 = sshll.u32 %s468, 4
          %s484 = int_to_ptr.vmem [resolvable:$true] %s483
          %489 = dma.vmem_to_hbm [thread:$0]  %s484, 384, %s482, %s465, 128, 128, 8
        $region48: #{tpu_custom_call.1} parent=31 // pred_fallthru
          _
        // Predicated region
        $region49: #{tpu_custom_call.1} parent=31 // pred_check
          %p490 = pneg %p154
        $region50: #{tpu_custom_call.1} parent=31 // pred_check_branch
          %492 = sbr.rel (%p490) target = $region52
        $region51: #{tpu_custom_call.1} parent=31 // pred_region
          %s493 = smul.u32 3, %s27
          %s495 = ssub.s32 192, 192
          %496 = vsyncadd %s470, %s495
          %s497 = smul.addr %s493, 64
          %s498 = scalar_lea.hbm %s4, %s497
          %s499 = sshll.u32 %s473, 4
          %s500 = int_to_ptr.vmem [resolvable:$true] %s499
          %505 = dma.vmem_to_hbm [thread:$0]  %s500, 192, %s498, %s470, 64, 64, 4
        $region52: #{tpu_custom_call.1} parent=31 // pred_fallthru
          _
      $region32: #{tpu_custom_call.1} parent=5 // pred_fallthru
        _
      %p506 = scmp.le.s32.totalorder 2, %s18
      // Predicated region
      $region53: #{tpu_custom_call.1} parent=5 // pred_check
        %p507 = pneg %p506
      $region54: #{tpu_custom_call.1} parent=5 // pred_check_branch
        %509 = sbr.rel (%p507) target = $region56
      $region55: #{tpu_custom_call.1} parent=5 // pred_region
        %s510 = ssub.s32 %s18, 2
        // Predicated region
        $region57: #{tpu_custom_call.1} parent=55 // pred_check
          %p511 = pneg %p134
        $region58: #{tpu_custom_call.1} parent=55 // pred_check_branch
          %513 = sbr.rel (%p511) target = $region60
        $region59: #{tpu_custom_call.1} parent=55 // pred_region
          %s514 = sand.u32 %s119, 1
          %s515 = scalar_lea.sflag [#allocation5], %s514
          %s516 = sand.u32 %s119, 1
          %s517 = smul.addr %s516, 24
          %s518 = scalar_lea.vmem [#allocation6], %s517
          %519 = dma.done %s515, 384
        $region60: #{tpu_custom_call.1} parent=55 // pred_fallthru
          _
        // Predicated region
        $region61: #{tpu_custom_call.1} parent=55 // pred_check
          %p520 = pneg %p160
        $region62: #{tpu_custom_call.1} parent=55 // pred_check_branch
          %522 = sbr.rel (%p520) target = $region64
        $region63: #{tpu_custom_call.1} parent=55 // pred_region
          %s523 = sand.u32 %s145, 1
          %s524 = scalar_lea.sflag [#allocation8], %s523
          %s525 = sand.u32 %s145, 1
          %s526 = smul.addr %s525, 12
          %s527 = scalar_lea.vmem [#allocation7], %s526
          %528 = dma.done %s524, 192
        $region64: #{tpu_custom_call.1} parent=55 // pred_fallthru
          _
      $region56: #{tpu_custom_call.1} parent=5 // pred_fallthru
        _
    $region6: #{tpu_custom_call.1} parent=1 // loop_footer
      %s22 = sadd.s32 1, %s18
    $region7: #{tpu_custom_call.1} parent=1 // loop_footer_branch
      %17 = sbr.rel target = $region3
    $region8: #{tpu_custom_call.1} parent=1 // loop_exit
      _
    %529 = vsyncpa [#allocation4], 1
    %s530 = scalar_lea.sflag [#allocation4], 1
    %531 = vsyncpa %s530, 1
    %532 = vsyncpa [#allocation5], 1
    %s533 = scalar_lea.sflag [#allocation5], 1
    %534 = vsyncpa %s533, 1
    %535 = vsyncpa [#allocation8], 1
    %s536 = scalar_lea.sflag [#allocation8], 1
    %537 = vsyncpa %s536, 1

</llo_original>
